<compile_context>
chip_gen: v5e
topology: v5e:2x2
jax: 0.10.0
libtpu: 0.0.40
codegen_flags: <defaults>
</compile_context>

<pallas_src>
import functools

import jax
import jax.numpy as jnp
from jax.experimental import pallas as pl
from jax.experimental.pallas import tpu as pltpu

# ---------------- hyper-parameters (match the PyTorch module defaults) -------
M = 0.4
S = 64.0
EPS = 1e-4


# ------------------------------- Pallas kernel -------------------------------
def cosface_kernel(emb_ref, w_ref, colscale_ref, label_ref, out_ref, *,
                   tc, m, s, eps):
    j = pl.program_id(0)

    w = w_ref[...]                                    # (E, tc) weight slab (bf16/f32)
    emb = emb_ref[...]                                # (B, E) embeddings (resident)
    if emb.dtype != w.dtype:                          # bf16 weight-stream path
        emb = emb.astype(w.dtype)

    # Un-normalized logits on the MXU with f32 accumulation.
    raw = jnp.dot(emb, w, preferred_element_type=jnp.float32)        # (B, tc) f32

    # colscale = s / ||W[:, c]||_2 was precomputed in the wrapper (f32).
    lim = (1.0 - eps) * s
    logits = jnp.clip(raw * colscale_ref[...], -lim, lim)            # (B, tc) f32

    # Additive cosine margin on the label column of this class tile.
    b = logits.shape[0]
    col_ids = jax.lax.broadcasted_iota(jnp.int32, (b, tc), 1)        # local col ids
    onehot = col_ids == (label_ref[...] - j * tc)                    # (B, tc) bool
    out_ref[...] = (logits - jnp.where(onehot, m * s, 0.0)).astype(out_ref.dtype)


# --------------------------- hardware introspection --------------------------
def _hw_info():
    kind = ""
    try:
        kind = jax.devices()[0].device_kind.lower()
    except Exception:
        pass
    is_v7 = "v7" in kind
    is_v5 = "v5" in kind
    vmem_bytes = (64 << 20) if is_v7 else (128 << 20)
    try:  # prefer the real number when the query is available
        vmem_bytes = int(pltpu.get_tpu_info().vmem_capacity_bytes)
    except Exception:
        pass
    return {
        "kind": kind,
        "vmem_bytes": vmem_bytes,
        "multi_tc": is_v7,                 # v7x: 2 TensorCores / chip
        "lane_align": 128 if is_v5 else 256,   # full MXU width (v5e MXU is 128-wide)
    }


# ------------------------------ VMEM accounting ------------------------------
def _per_tile_bytes(b, e, tc, w_bytes, out_bytes):
    """Bytes that scale with the class-tile width (incl. kernel intermediates)."""
    return (2 * e * tc * w_bytes        # double-buffered weight slab
            + 2 * b * tc * out_bytes    # double-buffered output block
            + 2 * 8 * tc * 4            # double-buffered (1, tc) colscale, sublane-padded
            + 3 * b * tc * 4)           # raw / masked result / iota f32-int32 temporaries


def _fixed_bytes(b, e, w_bytes, emb_bytes):
    return (b * e * emb_bytes           # resident embeddings block
            + b * e * w_bytes           # in-kernel embedding cast (bf16 path)
            + 2 * b * 128 * 4           # (B, 1) label block, lane-padded
            + (1 << 20))                # misc / spill headroom


def _pick_class_tile(b, e, c, w_bytes, out_bytes, emb_bytes, hw):
    """Largest lane-aligned class tile fitting a generation-aware VMEM budget."""
    align = hw["lane_align"]
    budget = int(0.70 * hw["vmem_bytes"])
    fixed = _fixed_bytes(b, e, w_bytes, emb_bytes)
    per_col = _per_tile_bytes(b, e, 1, w_bytes, out_bytes)
    tc = (budget - fixed) // max(per_col, 1)
    c_align = pl.cdiv(c, align) * align          # never need wider than the class dim
    tc = int(max(align, min(tc, c_align, 8192)))
    tc = max(align, (tc // align) * align)
    if hw["multi_tc"]:
        # v7x: keep >= 2 grid steps per TensorCore (>= 4 total) when possible so
        # both cores get work and each core still pipelines its weight DMAs.
        while tc > align and pl.cdiv(c_align, tc) < 4:
            tc -= align
    return tc


# --------------------------------- wrapper -----------------------------------
def cosface_forward(embeddings, norms, label, weight, *,
                    m=M, s=S, eps=EPS, tc=None,
                    weight_stream_dtype=jnp.bfloat16,
                    out_dtype=jnp.bfloat16):
    """CosFace logits: (clamp(emb @ l2norm_cols(W)) - m*onehot(label)) * s."""
    del norms                                        # CosFace ignores feature norms
    b_sz, e_sz = embeddings.shape
    e_w, c_sz = weight.shape
    assert e_w == e_sz

    hw = _hw_info()

    # Per-column scale (s folded in), computed once from the f32 master weights.
    w_f32 = weight.astype(jnp.float32)
    colscale = (s * jax.lax.rsqrt(
        jnp.maximum(jnp.sum(w_f32 * w_f32, axis=0, keepdims=True), 1e-24))
                ).astype(jnp.float32)                                   # (1, C)

    # Narrow the dominant HBM stream (bf16 by default).
    w_stream = weight.astype(weight_stream_dtype)

    w_itemsize = jnp.dtype(weight_stream_dtype).itemsize
    out_itemsize = jnp.dtype(out_dtype).itemsize
    emb_itemsize = jnp.dtype(embeddings.dtype).itemsize
    if tc is None:
        tc = _pick_class_tile(b_sz, e_sz, c_sz, w_itemsize, out_itemsize,
                              emb_itemsize, hw)

    # Pad the class dim to a multiple of tc; padded columns are sliced off below.
    c_pad = pl.cdiv(c_sz, tc) * tc
    if c_pad != c_sz:
        w_stream = jnp.pad(w_stream, ((0, 0), (0, c_pad - c_sz)))
        colscale = jnp.pad(colscale, ((0, 0), (0, c_pad - c_sz)))

    label2d = label.reshape(b_sz, 1).astype(jnp.int32)

    # Explicit scoped-VMEM limit, intermediate-inclusive, capped at physical VMEM.
    vmem_need = (_fixed_bytes(b_sz, e_sz, w_itemsize, emb_itemsize)
                 + _per_tile_bytes(b_sz, e_sz, tc, w_itemsize, out_itemsize))
    vmem_limit = int(min(hw["vmem_bytes"], max(32 << 20, vmem_need + (4 << 20))))

    kern = functools.partial(cosface_kernel, tc=tc, m=m, s=s, eps=eps)

    def _call(class_axis_semantics):
        return pl.pallas_call(
            kern,
            out_shape=jax.ShapeDtypeStruct((b_sz, c_pad), out_dtype),
            grid_spec=pltpu.PrefetchScalarGridSpec(
                num_scalar_prefetch=0,
                grid=(c_pad // tc,),
                in_specs=[
                    pl.BlockSpec((b_sz, e_sz), lambda j: (0, 0)),  # embeddings (resident)
                    pl.BlockSpec((e_sz, tc), lambda j: (0, j)),    # weight slab (streamed)
                    pl.BlockSpec((1, tc), lambda j: (0, j)),       # per-column scale
                    pl.BlockSpec((b_sz, 1), lambda j: (0, 0)),     # labels
                ],
                out_specs=pl.BlockSpec((b_sz, tc), lambda j: (0, j)),
            ),
            compiler_params=pltpu.CompilerParams(
                dimension_semantics=(class_axis_semantics,),
                vmem_limit_bytes=vmem_limit),
        )(embeddings, w_stream, colscale, label2d)

    if hw["multi_tc"]:
        # v7x: shard the class axis across both TensorCores explicitly.
        try:
            out = _call(pltpu.CORE_PARALLEL)
        except Exception:
            out = _call("parallel")
    else:
        out = _call("parallel")

    if c_pad != c_sz:
        out = out[:, :c_sz]
    return out


# --------------------------- pure-JAX reference ------------------------------
def cosface_reference(embeddings, norms, label, weight, *, m=M, s=S, eps=EPS):
    del norms
    kernel_norm = weight / jnp.linalg.norm(weight, axis=0, keepdims=True)
    cosine = jnp.clip(embeddings @ kernel_norm, -1.0 + eps, 1.0 - eps)
    m_hot = jax.nn.one_hot(label, weight.shape[1], dtype=cosine.dtype) * m
    return (cosine - m_hot) * s


# ------------------------------------ main ------------------------------------
if __name__ == "__main__":
    # Small synthetic shapes consistent with the module:
    #   batch B=8, embedding_size E=32, classnum C=512
    B, E, C = 8, 32, 512

    key = jax.random.PRNGKey(0)
    k_emb, k_nrm, k_lbl, k_w = jax.random.split(key, 4)

    # embeddings: l2-normalized feature vectors (B, E)
    raw = jax.random.normal(k_emb, (B, E), dtype=jnp.float32)
    embeddings = raw / jnp.linalg.norm(raw, axis=1, keepdims=True)
    # per-sample feature norms (B, 1) — accepted but unused by CosFace
    norms = jax.random.uniform(k_nrm, (B, 1), jnp.float32, minval=5.0, maxval=40.0)
    # labels in [0, C)
    label = jax.random.randint(k_lbl, (B,), 0, C, dtype=jnp.int32)
    # class-weight kernel: uniform(-1,1).renorm_(2,1,1e-5).mul_(1e5) ≈ unit-norm columns
    w_raw = jax.random.uniform(k_w, (E, C), jnp.float32, minval=-1.0, maxval=1.0)
    weight = w_raw / jnp.linalg.norm(w_raw, axis=0, keepdims=True)

    ref = cosface_reference(embeddings, norms, label, weight)

    # Tight-accuracy path: f32 weight stream, f32 logits.
    out_f32 = cosface_forward(embeddings, norms, label, weight,
                              weight_stream_dtype=jnp.float32,
                              out_dtype=jnp.float32)
    jax.block_until_ready(out_f32)
    assert out_f32.shape == (B, C) and out_f32.dtype == jnp.float32
    assert jnp.allclose(out_f32, ref, rtol=1e-3, atol=5e-2), (
        float(jnp.max(jnp.abs(out_f32 - ref))))

    # Default performance path: bf16 weight stream + bf16 logits (HBM-bound win).
    out_perf = cosface_forward(embeddings, norms, label, weight)
    jax.block_until_ready(out_perf)
    assert out_perf.shape == (B, C) and out_perf.dtype == jnp.bfloat16
    # bf16-appropriate tolerance: input rounding ~2^-8 on |cosine|<=1, scaled by
    # s=64, plus bf16 quantization of the (B, C) output itself.
    assert jnp.allclose(out_perf.astype(jnp.float32), ref, rtol=2e-2, atol=1.0), (
        float(jnp.max(jnp.abs(out_perf.astype(jnp.float32) - ref))))

    print("KERNEL_OK")
</pallas_src>

<mosaic_0001>
module attributes {stable_mosaic.version = 11 : i64} {
  func.func @cosface_kernel(%arg0: i32, %arg1: memref<8x32xf32, #tpu.memory_space<vmem>>, %arg2: memref<32x512xf32, #tpu.memory_space<vmem>>, %arg3: memref<1x512xf32, #tpu.memory_space<vmem>>, %arg4: memref<8x1xi32, #tpu.memory_space<vmem>>, %arg5: memref<8x512xf32, #tpu.memory_space<vmem>>) attributes {dimension_semantics = [#tpu.dimension_semantics<parallel>], iteration_bounds = array<i64: 1>, scalar_prefetch = 0 : i64, scratch_operands = 0 : i64, tpu.core_type = #tpu.core_type<tc>, window_params = [{pipeline_mode = #tpu.pipeline_mode<synchronous>, transform_indices = @transform_0, window_bounds = array<i64: 8, 32>}, {transform_indices = @transform_1, window_bounds = array<i64: 32, 512>}, {transform_indices = @transform_2, window_bounds = array<i64: 1, 512>}, {pipeline_mode = #tpu.pipeline_mode<synchronous>, transform_indices = @transform_3, window_bounds = array<i64: 8, 1>}, {transform_indices = @transform_4, window_bounds = array<i64: 8, 512>}]} {
    %c0 = arith.constant 0 : index
    %c0_0 = arith.constant 0 : index
    %0 = vector.load %arg2[%c0, %c0_0] : memref<32x512xf32, #tpu.memory_space<vmem>>, vector<32x512xf32>
    %c0_1 = arith.constant 0 : index
    %c0_2 = arith.constant 0 : index
    %1 = vector.load %arg1[%c0_1, %c0_2] : memref<8x32xf32, #tpu.memory_space<vmem>>, vector<8x32xf32>
    %cst = arith.constant dense<0.000000e+00> : vector<8x512xf32>
    %2 = tpu.matmul %1, %0, %cst {dimension_numbers = #tpu.dot_dimension_numbers<[1], [0], [0], [1], [0, 0, 1, 1], [], []>} : vector<8x32xf32>, vector<32x512xf32>, vector<8x512xf32> -> vector<8x512xf32>
    %c0_3 = arith.constant 0 : index
    %c0_4 = arith.constant 0 : index
    %3 = vector.load %arg3[%c0_3, %c0_4] : memref<1x512xf32, #tpu.memory_space<vmem>>, vector<1x512xf32>
    %4 = vector.broadcast %3 : vector<1x512xf32> to vector<8x512xf32>
    %5 = arith.mulf %2, %4 : vector<8x512xf32>
    %cst_5 = arith.constant -6.399360e+01 : f32
    %cst_6 = arith.constant 6.399360e+01 : f32
    %6 = vector.broadcast %cst_5 : f32 to vector<8x512xf32>
    %7 = arith.maximumf %6, %5 : vector<8x512xf32>
    %8 = vector.broadcast %cst_6 : f32 to vector<8x512xf32>
    %9 = arith.minimumf %8, %7 : vector<8x512xf32>
    %10 = tpu.iota {dimensions = array<i32: 1>} : vector<8x512xi32>
    %c0_7 = arith.constant 0 : index
    %c0_8 = arith.constant 0 : index
    %11 = vector.load %arg4[%c0_7, %c0_8] : memref<8x1xi32, #tpu.memory_space<vmem>>, vector<8x1xi32>
    %c512_i32 = arith.constant 512 : i32
    %12 = arith.muli %arg0, %c512_i32 : i32
    %13 = vector.broadcast %12 : i32 to vector<8x1xi32>
    %14 = arith.subi %11, %13 : vector<8x1xi32>
    %15 = vector.broadcast %14 : vector<8x1xi32> to vector<8x512xi32>
    %16 = arith.cmpi eq, %10, %15 : vector<8x512xi32>
    %cst_9 = arith.constant 2.560000e+01 : f32
    %cst_10 = arith.constant 0.000000e+00 : f32
    %17 = vector.broadcast %cst_9 : f32 to vector<8x512xf32>
    %18 = vector.broadcast %cst_10 : f32 to vector<8x512xf32>
    %19 = arith.select %16, %17, %18 : vector<8x512xi1>, vector<8x512xf32>
    %20 = arith.subf %9, %19 : vector<8x512xf32>
    %c0_11 = arith.constant 0 : index
    %c0_12 = arith.constant 0 : index
    %21 = vector.load %arg5[%c0_11, %c0_12] : memref<8x512xf32, #tpu.memory_space<vmem>>, vector<8x512xf32>
    tpu.vector_store %arg5[%c0_11, %c0_12], %20 {strides = array<i32>} : memref<8x512xf32, #tpu.memory_space<vmem>>, vector<8x512xf32>,
    return
  }
  func.func @transform_0(%arg0: i32) -> (i32, i32) {
    %c0_i32 = arith.constant 0 : i32
    %c0_i32_0 = arith.constant 0 : i32
    %c0_i32_1 = arith.constant 0 : i32
    return %c0_i32, %c0_i32_0 : i32, i32
  }
  func.func @transform_1(%arg0: i32) -> (i32, i32) {
    %c0_i32 = arith.constant 0 : i32
    %c0_i32_0 = arith.constant 0 : i32
    return %c0_i32, %arg0 : i32, i32
  }
  func.func @transform_2(%arg0: i32) -> (i32, i32) {
    %c0_i32 = arith.constant 0 : i32
    %c0_i32_0 = arith.constant 0 : i32
    return %c0_i32, %arg0 : i32, i32
  }
  func.func @transform_3(%arg0: i32) -> (i32, i32) {
    %c0_i32 = arith.constant 0 : i32
    %c0_i32_0 = arith.constant 0 : i32
    %c0_i32_1 = arith.constant 0 : i32
    return %c0_i32, %c0_i32_0 : i32, i32
  }
  func.func @transform_4(%arg0: i32) -> (i32, i32) {
    %c0_i32 = arith.constant 0 : i32
    %c0_i32_0 = arith.constant 0 : i32
    return %c0_i32, %arg0 : i32, i32
  }
}

</mosaic_0001>

<llo_original>
// kernel: tpu_custom_call.1
$region0: #{tpu_custom_call.1}
  #allocation0 [shape = 'u32[]', space=smem, size = 0x4, offset = 0x4, fixed_abs, tag = 'smem constant byte address 0x4 - core index']
  #allocation1 [shape = 'u32[72,128]{1,0:T(1,128)}', space=vmem, size = 0x9000, scoped, tag = 'internal scratch']
  %s0 = inlined_call_operand.vmem [shape: f32[8,32], index: 0, kind: input, shape index: {}]
  %s1 = inlined_call_operand.hbm [shape: f32[32,512], index: 1, kind: input, shape index: {}]
  %s2 = inlined_call_operand.hbm [shape: f32[1,512], index: 2, kind: input, shape index: {}]
  %s3 = inlined_call_operand.vmem [shape: s32[8,1], index: 3, kind: input, shape index: {}]
  %s4 = inlined_call_operand.hbm [shape: f32[8,512], index: 4, kind: output, shape index: {}]
  %s5 = sld [smem:[#allocation0]]
  $region34: #{tpu_custom_call.1} parent=0
    _
  %s7 = ssub.s32 1, %s5
  %s8 = scalar_select 0, %s7, %s5
  $region1: #{tpu_custom_call.1} parent=0
    #allocation2 [shape = 'u8[65536]{0}', space=vmem, size = 0x10000, scoped, tag = 'input window, operand 1, single buffered']
    #allocation3 [shape = 's32[1]{0}', space=sflag, size = 0x4, scoped, tag = 'scoped memory for tpu_custom_call.1']
    #allocation4 [shape = 's32[1]{0}', space=sflag, size = 0x4, scoped, tag = 'scoped memory for tpu_custom_call.1']
    #allocation5 [shape = 'u8[2048]{0}', space=vmem, size = 0x800, scoped, tag = 'input window, operand 2, single buffered']
    #allocation6 [shape = 's32[1]{0}', space=sflag, size = 0x4, scoped, tag = 'scoped memory for tpu_custom_call.1']
    #allocation7 [shape = 'u8[16384]{0}', space=vmem, size = 0x4000, scoped, tag = 'output window, operand 0, single buffered']
    %9 = vsyncpa [#allocation3], 0
    %10 = vsyncpa [#allocation6], 0
    %11 = vsyncpa [#allocation4], 0
    // Predicated region
    $region2: #{tpu_custom_call.1} parent=1 // pred_check
      _
    $region3: #{tpu_custom_call.1} parent=1 // pred_check_branch
      %13 = sbr.rel (0) target = $region5
    $region4: #{tpu_custom_call.1} parent=1 // pred_region
      _
    $region5: #{tpu_custom_call.1} parent=1 // pred_fallthru
      _
    // Predicated region
    $region6: #{tpu_custom_call.1} parent=1 // pred_check
      _
    $region7: #{tpu_custom_call.1} parent=1 // pred_check_branch
      %15 = sbr.rel (0) target = $region9
    $region8: #{tpu_custom_call.1} parent=1 // pred_region
      %17 = vsyncadd [#allocation3], 0
      %s18 = sshll.u32 %s1, 4
      %s19 = int_to_ptr.hbm [resolvable:$true] %s18
      %s20 = sshll.u32 [#allocation2], 4
      %s21 = int_to_ptr.vmem [resolvable:$true] %s20
      %26 = dma.hbm_to_vmem [thread:$0]  %s19, 2048, %s21, [#allocation3], 512, 512, 32
    $region9: #{tpu_custom_call.1} parent=1 // pred_fallthru
      _
    // Predicated region
    $region10: #{tpu_custom_call.1} parent=1 // pred_check
      _
    $region11: #{tpu_custom_call.1} parent=1 // pred_check_branch
      %28 = sbr.rel (0) target = $region13
    $region12: #{tpu_custom_call.1} parent=1 // pred_region
      %30 = vsyncadd [#allocation6], 0
      %s32 = sshll.u32 %s2, 4
      %s33 = int_to_ptr.hbm [resolvable:$true] %s32
      %s34 = sshll.u32 [#allocation5], 4
      %s35 = int_to_ptr.vmem [resolvable:$true] %s34
      %37 = dma.hbm_to_vmem [thread:$0]  %s33, 64, %s35, [#allocation6]
    $region13: #{tpu_custom_call.1} parent=1 // pred_fallthru
      _
    // Predicated region
    $region14: #{tpu_custom_call.1} parent=1 // pred_check
      _
    $region15: #{tpu_custom_call.1} parent=1 // pred_check_branch
      %39 = sbr.rel (0) target = $region17
    $region16: #{tpu_custom_call.1} parent=1 // pred_region
      _
    $region17: #{tpu_custom_call.1} parent=1 // pred_fallthru
      _
    // Predicated region
    $region18: #{tpu_custom_call.1} parent=1 // pred_check
      _
    $region19: #{tpu_custom_call.1} parent=1 // pred_check_branch
      %41 = sbr.rel (0) target = $region21
    $region20: #{tpu_custom_call.1} parent=1 // pred_region
      %43 = dma.done [#allocation3], 2048
    $region21: #{tpu_custom_call.1} parent=1 // pred_fallthru
      _
    // Predicated region
    $region22: #{tpu_custom_call.1} parent=1 // pred_check
      _
    $region23: #{tpu_custom_call.1} parent=1 // pred_check_branch
      %45 = sbr.rel (0) target = $region25
    $region24: #{tpu_custom_call.1} parent=1 // pred_region
      %47 = dma.done [#allocation6], 64
    $region25: #{tpu_custom_call.1} parent=1 // pred_fallthru
      _
    %v48 = vld [vmem:[#allocation2] sm:$0xff]
    %v49 = vld [vmem:[#allocation2 + $0x8] sm:$0xff]
    %v50 = vld [vmem:[#allocation2 + $0x10] sm:$0xff]
    %v51 = vld [vmem:[#allocation2 + $0x18] sm:$0xff]
    %v52 = vld [vmem:[#allocation2 + $0x20] sm:$0xff]
    %v53 = vld [vmem:[#allocation2 + $0x28] sm:$0xff]
    %v54 = vld [vmem:[#allocation2 + $0x30] sm:$0xff]
    %v55 = vld [vmem:[#allocation2 + $0x38] sm:$0xff]
    %v56 = vld [vmem:[#allocation2 + $0x40] sm:$0xff]
    %v57 = vld [vmem:[#allocation2 + $0x48] sm:$0xff]
    %v58 = vld [vmem:[#allocation2 + $0x50] sm:$0xff]
    %v59 = vld [vmem:[#allocation2 + $0x58] sm:$0xff]
    %v60 = vld [vmem:[#allocation2 + $0x60] sm:$0xff]
    %v61 = vld [vmem:[#allocation2 + $0x68] sm:$0xff]
    %v62 = vld [vmem:[#allocation2 + $0x70] sm:$0xff]
    %v63 = vld [vmem:[#allocation2 + $0x78] sm:$0xff]
    %v64 = vld [vmem:[%s0] sm:$0xff]
    %vm65 = vcmask 261120
    %v67 = vsel %vm65, %v64, 0
    %69 = vmatpush.msra.mxu0 0.0
    %70 = vmatpush.msra.mxu0 0.0
    %71 = vmatpush.msra.mxu0 0.0
    %72 = vmatpush.msra.mxu0 0.0
    %73 = vmatpush.msra.mxu0 0.0
    %74 = vmatpush.msra.mxu0 0.0
    %75 = vmatpush.msra.mxu0 0.0
    %76 = vmatpush.msra.mxu0 0.0
    %77 = vmatpush.msra.mxu0 0.0
    %78 = vmatpush.msra.mxu0 0.0
    %79 = vmatpush.msra.mxu0 0.0
    %80 = vmatpush.msra.mxu0 0.0
    %81 = vmatpush.msra.mxu0 %v60
    %82 = vmatpush.msra.mxu0 %v56
    %83 = vmatpush.msra.mxu0 %v52
    %84 = vmatpush.msra.mxu0 %v48
    %85 = vmatmul.f32.gmra.mxu0 %v67
    %v86 = vpop.f32.mrf.mxu0
    %v87 = vadd.f32 0.0, %v86
    %88 = vdwg.mxu0
    %89 = vmatpush.msra.mxu0 0.0
    %90 = vmatpush.msra.mxu0 0.0
    %91 = vmatpush.msra.mxu0 0.0
    %92 = vmatpush.msra.mxu0 0.0
    %93 = vmatpush.msra.mxu0 0.0
    %94 = vmatpush.msra.mxu0 0.0
    %95 = vmatpush.msra.mxu0 0.0
    %96 = vmatpush.msra.mxu0 0.0
    %97 = vmatpush.msra.mxu0 0.0
    %98 = vmatpush.msra.mxu0 0.0
    %99 = vmatpush.msra.mxu0 0.0
    %100 = vmatpush.msra.mxu0 0.0
    %101 = vmatpush.msra.mxu0 %v61
    %102 = vmatpush.msra.mxu0 %v57
    %103 = vmatpush.msra.mxu0 %v53
    %104 = vmatpush.msra.mxu0 %v49
    %105 = vmatmul.f32.gmra.mxu0 %v67
    %v106 = vpop.f32.mrf.mxu0
    %v107 = vadd.f32 0.0, %v106
    %108 = vdwg.mxu0
    %109 = vmatpush.msra.mxu0 0.0
    %110 = vmatpush.msra.mxu0 0.0
    %111 = vmatpush.msra.mxu0 0.0
    %112 = vmatpush.msra.mxu0 0.0
    %113 = vmatpush.msra.mxu0 0.0
    %114 = vmatpush.msra.mxu0 0.0
    %115 = vmatpush.msra.mxu0 0.0
    %116 = vmatpush.msra.mxu0 0.0
    %117 = vmatpush.msra.mxu0 0.0
    %118 = vmatpush.msra.mxu0 0.0
    %119 = vmatpush.msra.mxu0 0.0
    %120 = vmatpush.msra.mxu0 0.0
    %121 = vmatpush.msra.mxu0 %v62
    %122 = vmatpush.msra.mxu0 %v58
    %123 = vmatpush.msra.mxu0 %v54
    %124 = vmatpush.msra.mxu0 %v50
    %125 = vmatmul.f32.gmra.mxu0 %v67
    %v126 = vpop.f32.mrf.mxu0
    %v127 = vadd.f32 0.0, %v126
    %128 = vdwg.mxu0
    %129 = vmatpush.msra.mxu0 0.0
    %130 = vmatpush.msra.mxu0 0.0
    %131 = vmatpush.msra.mxu0 0.0
    %132 = vmatpush.msra.mxu0 0.0
    %133 = vmatpush.msra.mxu0 0.0
    %134 = vmatpush.msra.mxu0 0.0
    %135 = vmatpush.msra.mxu0 0.0
    %136 = vmatpush.msra.mxu0 0.0
    %137 = vmatpush.msra.mxu0 0.0
    %138 = vmatpush.msra.mxu0 0.0
    %139 = vmatpush.msra.mxu0 0.0
    %140 = vmatpush.msra.mxu0 0.0
    %141 = vmatpush.msra.mxu0 %v63
    %142 = vmatpush.msra.mxu0 %v59
    %143 = vmatpush.msra.mxu0 %v55
    %144 = vmatpush.msra.mxu0 %v51
    %145 = vmatmul.f32.gmra.mxu0 %v67
    %v146 = vpop.f32.mrf.mxu0
    %v147 = vadd.f32 0.0, %v146
    %148 = vdwg.mxu0
    %v149 = vld [vmem:[#allocation5] sm:$0xf]
    %v151 = vperm.slane %v149, 0
    %v152 = vperm.slane %v149, 1
    %v153 = vperm.slane %v149, 2
    %v154 = vperm.slane %v149, 3
    %v159 = vmul.f32 %v87, %v151
    %v160 = vmul.f32 %v107, %v152
    %v161 = vmul.f32 %v127, %v153
    %v162 = vmul.f32 %v147, %v154
    %v163 = vmax.f32 %v159, -63.9936
    %v164 = vmax.f32 %v160, -63.9936
    %v165 = vmax.f32 %v161, -63.9936
    %v166 = vmax.f32 %v162, -63.9936
    %v167 = vmin.f32 %v163, 63.9936
    %v168 = vmin.f32 %v164, 63.9936
    %v169 = vmin.f32 %v165, 63.9936
    %v170 = vmin.f32 %v166, 63.9936
    %v171 = vlaneseq
    %v172 = vand.u32 %v171, 127
    %v173 = vadd.s32 %v172, 128
    %v174 = vadd.s32 %v172, 256
    %v175 = vadd.s32 %v172, 384
    %v176 = vld [vmem:[%s3] sm:$0xff]
    %s177 = smul.u32 0, 512
    %v178 = vstv %s177
    %v179 = vsub.s32 %v176, %v178
    %180 = vset.pattern.permute.xlu0 0
    %181 = vperm.xlu0 %180, %v179
    %v182 = vpop.permute.xlu0 %181
    %vm183 = vcmp.eq.s32.totalorder %v172, %v182
    %vm184 = vcmp.eq.s32.totalorder %v173, %v182
    %vm185 = vcmp.eq.s32.totalorder %v174, %v182
    %vm186 = vcmp.eq.s32.totalorder %v175, %v182
    %v187 = vsel %vm183, 25.6, 0.0
    %v188 = vsel %vm184, 25.6, 0.0
    %v189 = vsel %vm185, 25.6, 0.0
    %v190 = vsel %vm186, 25.6, 0.0
    %v191 = vsub.f32 %v167, %v187
    %v192 = vsub.f32 %v168, %v188
    %v193 = vsub.f32 %v169, %v189
    %v194 = vsub.f32 %v170, %v190
    %195 = vst [vmem:[#allocation7] sm:$0xff] %v191
    %196 = vst [vmem:[#allocation7 + $0x8] sm:$0xff] %v192
    %197 = vst [vmem:[#allocation7 + $0x10] sm:$0xff] %v193
    %198 = vst [vmem:[#allocation7 + $0x18] sm:$0xff] %v194
    // Predicated region
    $region26: #{tpu_custom_call.1} parent=1 // pred_check
      _
    $region27: #{tpu_custom_call.1} parent=1 // pred_check_branch
      %200 = sbr.rel (0) target = $region29
    $region28: #{tpu_custom_call.1} parent=1 // pred_region
      %202 = vsyncadd [#allocation4], 0
      %s204 = sshll.u32 [#allocation7], 4
      %s205 = int_to_ptr.vmem [resolvable:$true] %s204
      %s206 = sshll.u32 %s4, 4
      %s207 = int_to_ptr.hbm [resolvable:$true] %s206
      %209 = dma.vmem_to_hbm [thread:$0]  %s205, 512, %s207, [#allocation4]
    $region29: #{tpu_custom_call.1} parent=1 // pred_fallthru
      _
    // Predicated region
    $region30: #{tpu_custom_call.1} parent=1 // pred_check
      _
    $region31: #{tpu_custom_call.1} parent=1 // pred_check_branch
      %211 = sbr.rel (0) target = $region33
    $region32: #{tpu_custom_call.1} parent=1 // pred_region
      %213 = dma.done [#allocation4], 512
    $region33: #{tpu_custom_call.1} parent=1 // pred_fallthru
      _
    %214 = vsyncpa [#allocation3], 1
    %215 = vsyncpa [#allocation6], 1
    %216 = vsyncpa [#allocation4], 1

</llo_original>
